<compile_context>
chip_gen: v7x
topology: tpu7x:2x2x1
jax: 0.10.0
libtpu: 0.0.40
codegen_flags: <defaults>
</compile_context>

<pallas_src>
import jax
import jax.numpy as jnp
from jax import lax
from jax.experimental import pallas as pl
from jax.experimental.pallas import tpu as pltpu


# ----------------------------- Pallas kernel --------------------------------
def _nig_kernel(x_ref, w1_ref, b1_ref, w2_ref, b2_ref, w3_ref, b3_ref, out_ref):
    # x streams in as bf16; upcast once on the VPU, accumulate in f32 on the MXU.
    x = x_ref[...].astype(jnp.float32)

    # fc1 + relu
    h = jnp.dot(x, w1_ref[...], preferred_element_type=jnp.float32) + b1_ref[...]
    h = jnp.maximum(h, 0.0)

    # fc2 + relu
    h = jnp.dot(h, w2_ref[...], preferred_element_type=jnp.float32) + b2_ref[...]
    h = jnp.maximum(h, 0.0)

    # fc3: columns pre-grouped as [mu | log_v | log_v(dup, for alpha) | log_beta]
    out = jnp.dot(h, w3_ref[...], preferred_element_type=jnp.float32) + b3_ref[...]

    # Lane-mask-select epilogue: one full-block pass, no slices, no concat.
    # softplus (stable form) runs on the EUP slot which is otherwise idle, so
    # computing it for the mu lanes and masking it away is free.
    d = out_ref.shape[-1] // 4
    col = lax.broadcasted_iota(jnp.int32, out.shape, 1)
    sp = jnp.maximum(out, 0.0) + jnp.log1p(jnp.exp(-jnp.abs(out)))
    is_mu = col < d
    is_alpha = (col >= 2 * d) & (col < 3 * d)
    # [0,d): mu (identity); [d,2d): v = sp; [2d,3d): alpha = sp + 1; [3d,4d): beta = sp
    out_ref[...] = jnp.where(is_mu, out, jnp.where(is_alpha, sp + 1.0, sp))
    # TODO(synk): for a fully lane-dense store (n_out=16 << 128 lanes), fold 8
    # batch rows into the lane axis (out block (tb//8, 128)); needs a
    # sublane->lane relayout in-kernel, left out to keep lowering robust.


# ------------------------------ wrapper --------------------------------------
def _round_up(a, m):
    return ((a + m - 1) // m) * m


def nig_forward(x, params, *, block_rows=4096, x_dtype=jnp.bfloat16,
                vmem_cap_bytes=48 * 1024 * 1024):
    """params = (w1, b1, w2, b2, w3_grouped4, b3_grouped4); biases shaped (1, out).

    Returns (mu, v, alpha, beta), each (batch, dim_out) float32.
    """
    w1, b1, w2, b2, w3, b3 = params
    B, dim_in = x.shape
    hidden = w1.shape[1]
    n_out = w3.shape[1]            # 4 * dim_out  (mu, v, alpha, beta heads)
    dim_out = n_out // 4

    # bf16 input streaming (matmul accumulation stays f32 inside the kernel).
    # TODO(synk): callers should pass bf16 activations directly to avoid the
    # standalone convert pass this introduces for f32 inputs.
    if x.dtype != x_dtype:
        x = x.astype(x_dtype)

    # ---- batch tile size -----------------------------------------------------
    block_rows = max(16, (block_rows // 16) * 16)        # bf16 sublane packing
    lane = 128
    itemsize_x = jnp.dtype(x_dtype).itemsize
    # Per-row VMEM bytes: double-buffered x/out blocks + lane-padded intermediates.
    per_row = (_round_up(dim_in, lane) * itemsize_x * 2        # x block  x2 buffers
               + _round_up(n_out, lane) * 4 * 2                # out block x2 buffers
               + _round_up(hidden, lane) * 4 * 2)              # h intermediates
    weight_bytes = sum(int(a.size) * a.dtype.itemsize for a in (w1, b1, w2, b2, w3, b3))
    budget = vmem_cap_bytes - weight_bytes - (4 << 20)         # compiler headroom
    tb_vmem_max = max(16, (max(budget, 0) // per_row) // 16 * 16)

    if B < 32:
        tb = B                                   # single block == full array dims
    elif B <= 2 * block_rows:
        # Guarantee >= 2 grid steps so both v7x TensorCores participate.
        tb = min(max(16, _round_up(pl.cdiv(B, 2), 16)), tb_vmem_max)
    else:
        tb = min(block_rows, tb_vmem_max)

    grid = (pl.cdiv(B, tb),)                     # ragged last block: no jnp.pad

    # Derived (not hard-coded) scoped-VMEM limit; capped for v7x's 64 MiB.
    vmem_needed = weight_bytes + per_row * tb + (2 << 20)
    vmem_limit = int(min(max(2 * vmem_needed, 16 << 20), vmem_cap_bytes))

    resident = lambda shape: pl.BlockSpec(shape, lambda i: (0, 0))

    slab = pl.pallas_call(
        _nig_kernel,
        out_shape=jax.ShapeDtypeStruct((B, n_out), jnp.float32),
        grid=grid,
        in_specs=[
            pl.BlockSpec((tb, dim_in), lambda i: (i, 0)),   # x: tiled over batch
            resident((dim_in, hidden)),                     # w1 (VMEM-resident)
            resident((1, hidden)),                          # b1
            resident((hidden, hidden)),                     # w2
            resident((1, hidden)),                          # b2
            resident((hidden, n_out)),                      # w3 (4 grouped heads)
            resident((1, n_out)),                           # b3
        ],
        out_specs=pl.BlockSpec((tb, n_out), lambda i: (i, 0)),
        compiler_params=pltpu.CompilerParams(
            dimension_semantics=("parallel",),
            vmem_limit_bytes=vmem_limit,
        ),
    )(x, w1, b1, w2, b2, w3, b3)

    # Pure static slices — all per-element math (softplus, +1) already done in-kernel.
    mu = slab[:, 0:dim_out]
    v = slab[:, dim_out:2 * dim_out]
    alpha = slab[:, 2 * dim_out:3 * dim_out]
    beta = slab[:, 3 * dim_out:4 * dim_out]
    return mu, v, alpha, beta


# --------------------------- parameter setup ---------------------------------
def init_params(key, dim_in, dim_out, hidden_dim):
    """PyTorch-style nn.Linear init (uniform +-1/sqrt(fan_in)).

    Returns (grouped_params_for_kernel, raw_params_for_reference).
    """
    def linear(key, fan_in, fan_out):
        kw, kb = jax.random.split(key)
        bound = 1.0 / jnp.sqrt(fan_in)
        w = jax.random.uniform(kw, (fan_in, fan_out), jnp.float32, -bound, bound)
        b = jax.random.uniform(kb, (1, fan_out), jnp.float32, -bound, bound)
        return w, b

    k1, k2, k3 = jax.random.split(key, 3)
    w1, b1 = linear(k1, dim_in, hidden_dim)
    w2, b2 = linear(k2, hidden_dim, hidden_dim)
    w3, b3 = linear(k3, hidden_dim, dim_out * 4)

    # PyTorch reshapes (B, 4*dim_out) -> (B, dim_out, 4); slot k of output i is
    # column 4*i + k.  Grouped heads for the kernel slab:
    #   [mu (slot0) | log_v (slot1) | log_v again (alpha = softplus+1) | log_beta (slot3)]
    # slot 2 (log_alpha) is never used by the module (alpha = v + 1).
    idx = jnp.arange(dim_out)
    perm = jnp.concatenate([4 * idx + 0, 4 * idx + 1, 4 * idx + 1, 4 * idx + 3])
    w3g = w3[:, perm]
    b3g = b3[:, perm]
    return (w1, b1, w2, b2, w3g, b3g), (w1, b1, w2, b2, w3, b3)


# --------------------------- pure-JAX reference -------------------------------
def reference_forward(x, raw_params):
    w1, b1, w2, b2, w3, b3 = raw_params
    h = jnp.maximum(x @ w1 + b1, 0.0)
    h = jnp.maximum(h @ w2 + b2, 0.0)
    out = (h @ w3 + b3).reshape(x.shape[0], -1, 4)
    mu, log_v, _log_alpha, log_beta = [out[..., i] for i in range(4)]
    v = jnp.logaddexp(0.0, log_v)
    beta = jnp.logaddexp(0.0, log_beta)
    return mu, v, v + 1.0, beta


# ------------------------------- main -----------------------------------------
if __name__ == "__main__":
    batch, dim_in, hidden_dim, dim_out = 64, 16, 32, 4

    key = jax.random.PRNGKey(0)
    kx, kp = jax.random.split(key)
    x = jax.random.normal(kx, (batch, dim_in), dtype=jnp.float32)
    params_grouped, params_raw = init_params(kp, dim_in, dim_out, hidden_dim)

    # block_rows=16 so the small example still exercises a multi-step grid.
    fwd = jax.jit(lambda xx: nig_forward(xx, params_grouped, block_rows=16))
    mu, v, alpha, beta = jax.block_until_ready(fwd(x))

    # Correctness check: the kernel streams bf16 x, so compare against the f32
    # reference fed the same bf16-quantized input (deliberately relaxed tol).
    x_q = x.astype(jnp.bfloat16).astype(jnp.float32)
    mu_r, v_r, alpha_r, beta_r = reference_forward(x_q, params_raw)
    for got, want, name in ((mu, mu_r, "mu"), (v, v_r, "v"),
                            (alpha, alpha_r, "alpha"), (beta, beta_r, "beta")):
        assert got.shape == (batch, dim_out), f"{name} shape"
        assert jnp.allclose(got, want, atol=1e-4, rtol=1e-4), f"{name} mismatch"

    print("KERNEL_OK")
</pallas_src>

<mosaic_0001>
module attributes {stable_mosaic.version = 11 : i64} {
  func.func @_nig_kernel(%arg0: i32, %arg1: memref<16x16xbf16, #tpu.memory_space<vmem>>, %arg2: memref<16x32xf32, #tpu.memory_space<vmem>>, %arg3: memref<1x32xf32, #tpu.memory_space<vmem>>, %arg4: memref<32x32xf32, #tpu.memory_space<vmem>>, %arg5: memref<1x32xf32, #tpu.memory_space<vmem>>, %arg6: memref<32x16xf32, #tpu.memory_space<vmem>>, %arg7: memref<1x16xf32, #tpu.memory_space<vmem>>, %arg8: memref<16x16xf32, #tpu.memory_space<vmem>>) attributes {dimension_semantics = [#tpu.dimension_semantics<parallel>], iteration_bounds = array<i64: 4>, scalar_prefetch = 0 : i64, scratch_operands = 0 : i64, tpu.core_type = #tpu.core_type<tc>, window_params = [{transform_indices = @transform_0, window_bounds = array<i64: 16, 16>}, {pipeline_mode = #tpu.pipeline_mode<synchronous>, transform_indices = @transform_1, window_bounds = array<i64: 16, 32>}, {pipeline_mode = #tpu.pipeline_mode<synchronous>, transform_indices = @transform_2, window_bounds = array<i64: 1, 32>}, {pipeline_mode = #tpu.pipeline_mode<synchronous>, transform_indices = @transform_3, window_bounds = array<i64: 32, 32>}, {pipeline_mode = #tpu.pipeline_mode<synchronous>, transform_indices = @transform_4, window_bounds = array<i64: 1, 32>}, {pipeline_mode = #tpu.pipeline_mode<synchronous>, transform_indices = @transform_5, window_bounds = array<i64: 32, 16>}, {pipeline_mode = #tpu.pipeline_mode<synchronous>, transform_indices = @transform_6, window_bounds = array<i64: 1, 16>}, {transform_indices = @transform_7, window_bounds = array<i64: 16, 16>}]} {
    %c0 = arith.constant 0 : index
    %c0_0 = arith.constant 0 : index
    %0 = vector.load %arg1[%c0, %c0_0] : memref<16x16xbf16, #tpu.memory_space<vmem>>, vector<16x16xbf16>
    %1 = arith.extf %0 : vector<16x16xbf16> to vector<16x16xf32>
    %c0_1 = arith.constant 0 : index
    %c0_2 = arith.constant 0 : index
    %2 = vector.load %arg2[%c0_1, %c0_2] : memref<16x32xf32, #tpu.memory_space<vmem>>, vector<16x32xf32>
    %cst = arith.constant dense<0.000000e+00> : vector<16x32xf32>
    %3 = tpu.matmul %1, %2, %cst {dimension_numbers = #tpu.dot_dimension_numbers<[1], [0], [0], [1], [0, 0, 1, 1], [], []>} : vector<16x16xf32>, vector<16x32xf32>, vector<16x32xf32> -> vector<16x32xf32>
    %c0_3 = arith.constant 0 : index
    %c0_4 = arith.constant 0 : index
    %4 = vector.load %arg3[%c0_3, %c0_4] : memref<1x32xf32, #tpu.memory_space<vmem>>, vector<1x32xf32>
    %5 = vector.broadcast %4 : vector<1x32xf32> to vector<16x32xf32>
    %6 = arith.addf %3, %5 : vector<16x32xf32>
    %cst_5 = arith.constant 0.000000e+00 : f32
    %7 = vector.broadcast %cst_5 : f32 to vector<16x32xf32>
    %8 = arith.maximumf %6, %7 : vector<16x32xf32>
    %c0_6 = arith.constant 0 : index
    %c0_7 = arith.constant 0 : index
    %9 = vector.load %arg4[%c0_6, %c0_7] : memref<32x32xf32, #tpu.memory_space<vmem>>, vector<32x32xf32>
    %cst_8 = arith.constant dense<0.000000e+00> : vector<16x32xf32>
    %10 = tpu.matmul %8, %9, %cst_8 {dimension_numbers = #tpu.dot_dimension_numbers<[1], [0], [0], [1], [0, 0, 1, 1], [], []>} : vector<16x32xf32>, vector<32x32xf32>, vector<16x32xf32> -> vector<16x32xf32>
    %c0_9 = arith.constant 0 : index
    %c0_10 = arith.constant 0 : index
    %11 = vector.load %arg5[%c0_9, %c0_10] : memref<1x32xf32, #tpu.memory_space<vmem>>, vector<1x32xf32>
    %12 = vector.broadcast %11 : vector<1x32xf32> to vector<16x32xf32>
    %13 = arith.addf %10, %12 : vector<16x32xf32>
    %cst_11 = arith.constant 0.000000e+00 : f32
    %14 = vector.broadcast %cst_11 : f32 to vector<16x32xf32>
    %15 = arith.maximumf %13, %14 : vector<16x32xf32>
    %c0_12 = arith.constant 0 : index
    %c0_13 = arith.constant 0 : index
    %16 = vector.load %arg6[%c0_12, %c0_13] : memref<32x16xf32, #tpu.memory_space<vmem>>, vector<32x16xf32>
    %cst_14 = arith.constant dense<0.000000e+00> : vector<16x16xf32>
    %17 = tpu.matmul %15, %16, %cst_14 {dimension_numbers = #tpu.dot_dimension_numbers<[1], [0], [0], [1], [0, 0, 1, 1], [], []>} : vector<16x32xf32>, vector<32x16xf32>, vector<16x16xf32> -> vector<16x16xf32>
    %c0_15 = arith.constant 0 : index
    %c0_16 = arith.constant 0 : index
    %18 = vector.load %arg7[%c0_15, %c0_16] : memref<1x16xf32, #tpu.memory_space<vmem>>, vector<1x16xf32>
    %19 = vector.broadcast %18 : vector<1x16xf32> to vector<16x16xf32>
    %20 = arith.addf %17, %19 : vector<16x16xf32>
    %21 = tpu.iota {dimensions = array<i32: 1>} : vector<16x16xi32>
    %cst_17 = arith.constant 0.000000e+00 : f32
    %22 = vector.broadcast %cst_17 : f32 to vector<16x16xf32>
    %23 = arith.maximumf %20, %22 : vector<16x16xf32>
    %24 = math.absf %20 : vector<16x16xf32>
    %cst_18 = arith.constant 0.000000e+00 : f32
    %25 = vector.broadcast %cst_18 : f32 to vector<16x16xf32>
    %26 = arith.subf %25, %24 : vector<16x16xf32>
    %27 = math.exp %26 : vector<16x16xf32>
    %28 = math.log1p %27 : vector<16x16xf32>
    %29 = arith.addf %23, %28 : vector<16x16xf32>
    %c4_i32 = arith.constant 4 : i32
    %30 = vector.broadcast %c4_i32 : i32 to vector<16x16xi32>
    %31 = arith.cmpi slt, %21, %30 : vector<16x16xi32>
    %c8_i32 = arith.constant 8 : i32
    %32 = vector.broadcast %c8_i32 : i32 to vector<16x16xi32>
    %33 = arith.cmpi sge, %21, %32 : vector<16x16xi32>
    %c12_i32 = arith.constant 12 : i32
    %34 = vector.broadcast %c12_i32 : i32 to vector<16x16xi32>
    %35 = arith.cmpi slt, %21, %34 : vector<16x16xi32>
    %36 = arith.andi %33, %35 : vector<16x16xi1>
    %cst_19 = arith.constant 1.000000e+00 : f32
    %37 = vector.broadcast %cst_19 : f32 to vector<16x16xf32>
    %38 = arith.addf %29, %37 : vector<16x16xf32>
    %39 = arith.select %36, %38, %29 : vector<16x16xi1>, vector<16x16xf32>
    %40 = arith.select %31, %20, %39 : vector<16x16xi1>, vector<16x16xf32>
    %c0_20 = arith.constant 0 : index
    %c0_21 = arith.constant 0 : index
    %41 = vector.load %arg8[%c0_20, %c0_21] : memref<16x16xf32, #tpu.memory_space<vmem>>, vector<16x16xf32>
    tpu.vector_store %arg8[%c0_20, %c0_21], %40 {strides = array<i32>} : memref<16x16xf32, #tpu.memory_space<vmem>>, vector<16x16xf32>,
    return
  }
  func.func @transform_0(%arg0: i32) -> (i32, i32) {
    %c0_i32 = arith.constant 0 : i32
    %c0_i32_0 = arith.constant 0 : i32
    return %arg0, %c0_i32 : i32, i32
  }
  func.func @transform_1(%arg0: i32) -> (i32, i32) {
    %c0_i32 = arith.constant 0 : i32
    %c0_i32_0 = arith.constant 0 : i32
    %c0_i32_1 = arith.constant 0 : i32
    return %c0_i32, %c0_i32_0 : i32, i32
  }
  func.func @transform_2(%arg0: i32) -> (i32, i32) {
    %c0_i32 = arith.constant 0 : i32
    %c0_i32_0 = arith.constant 0 : i32
    %c0_i32_1 = arith.constant 0 : i32
    return %c0_i32, %c0_i32_0 : i32, i32
  }
  func.func @transform_3(%arg0: i32) -> (i32, i32) {
    %c0_i32 = arith.constant 0 : i32
    %c0_i32_0 = arith.constant 0 : i32
    %c0_i32_1 = arith.constant 0 : i32
    return %c0_i32, %c0_i32_0 : i32, i32
  }
  func.func @transform_4(%arg0: i32) -> (i32, i32) {
    %c0_i32 = arith.constant 0 : i32
    %c0_i32_0 = arith.constant 0 : i32
    %c0_i32_1 = arith.constant 0 : i32
    return %c0_i32, %c0_i32_0 : i32, i32
  }
  func.func @transform_5(%arg0: i32) -> (i32, i32) {
    %c0_i32 = arith.constant 0 : i32
    %c0_i32_0 = arith.constant 0 : i32
    %c0_i32_1 = arith.constant 0 : i32
    return %c0_i32, %c0_i32_0 : i32, i32
  }
  func.func @transform_6(%arg0: i32) -> (i32, i32) {
    %c0_i32 = arith.constant 0 : i32
    %c0_i32_0 = arith.constant 0 : i32
    %c0_i32_1 = arith.constant 0 : i32
    return %c0_i32, %c0_i32_0 : i32, i32
  }
  func.func @transform_7(%arg0: i32) -> (i32, i32) {
    %c0_i32 = arith.constant 0 : i32
    %c0_i32_0 = arith.constant 0 : i32
    return %arg0, %c0_i32 : i32, i32
  }
}

</mosaic_0001>

<llo_original>
// kernel: _lambda_.1
$region0: #{_lambda_.1}
  #allocation0 [shape = 'u32[]', space=smem, size = 0x4, offset = 0x4, fixed_abs, tag = 'smem constant byte address 0x4 - core index']
  #allocation1 [shape = 'u32[144,128]{1,0:T(1,128)}', space=vmem, size = 0x12000, scoped, tag = 'internal scratch']
  %s0 = inlined_call_operand.vmem [shape: bf16[64,16], index: 0, kind: input, shape index: {}]
  %s1 = inlined_call_operand.hbm [shape: f32[16,32], index: 1, kind: input, shape index: {}]
  %s2 = inlined_call_operand.vmem [shape: f32[1,32], index: 2, kind: input, shape index: {}]
  %s3 = inlined_call_operand.vmem [shape: f32[32,32], index: 3, kind: input, shape index: {}]
  %s4 = inlined_call_operand.vmem [shape: f32[1,32], index: 4, kind: input, shape index: {}]
  %s5 = inlined_call_operand.vmem [shape: f32[32,16], index: 5, kind: input, shape index: {}]
  %s6 = inlined_call_operand.vmem [shape: f32[1,16], index: 6, kind: input, shape index: {}]
  %s7 = inlined_call_operand.vmem [shape: f32[64,16], index: 7, kind: output, shape index: {}]
  %s8 = sld [smem:[#allocation0]]
  $region65: #{_lambda_.1} parent=0
    _
  %s10 = ssub.s32 1, %s8
  %s11 = scalar_select 0, %s10, %s8
  $region1: #{_lambda_.1} parent=0
    #allocation2 [shape = 'u8[8192]{0}', space=vmem, size = 0x2000, scoped, tag = 'input window, operand 1, single buffered']
    #allocation3 [shape = 's32[2]{0}', space=sflag, size = 0x8, scoped, tag = 'scoped memory for _lambda_.1']
    %12 = vsyncpa [#allocation3], 0
    loop: start=0, step=1, limit=6
    $region2: #{_lambda_.1} parent=1 // loop_pre_header
      _
    $region3: #{_lambda_.1} parent=1 // loop_header
      %s14 = sphi 0, %s18
      %p15 = scmp.ge.s32.totalorder %s14, 6
      %s24 = sphi 0, %s26
      %s27 = sphi 0, %s24
      %s28 = sphi 0, %s27
      %s44 = sphi 0, %s28
      %s48 = sphi 0, %s48
      %s50 = sphi 0, %s48
      %s51 = sphi 0, %s50
      %s65 = sphi 0, %s51
      %s69 = sphi 0, %s69
      %s71 = sphi 0, %s69
      %s72 = sphi 0, %s71
      %s86 = sphi 0, %s72
      %s90 = sphi 0, %s90
      %s92 = sphi 0, %s90
      %s93 = sphi 0, %s92
      %s107 = sphi 0, %s93
      %s111 = sphi 0, %s111
      %s113 = sphi 0, %s111
      %s114 = sphi 0, %s113
      %s128 = sphi 0, %s114
      %s132 = sphi 0, %s132
      %s134 = sphi 0, %s132
      %s135 = sphi 0, %s134
      %s149 = sphi 0, %s135
      %s153 = sphi 0, %s153
      %s155 = sphi 0, %s153
      %s156 = sphi 0, %s155
      %s170 = sphi 0, %s156
      %s176 = sphi 0, %s178
      %s179 = sphi 0, %s176
      %s180 = sphi 0, %s179
      %s196 = sphi 0, %s180
    $region4: #{_lambda_.1} parent=1 // loop_header_branch
      %17 = sbr.rel (%p15) target = $region8
    $region5: #{_lambda_.1} parent=1 // loop_body
      %s19 = ssub.s32 %s14, 1
      %s20 = ssub.s32 %s14, 2
      %s21 = sadd.s32 %s14, 1
      %s22 = ssub.s32 %s14, %s21
      %p23 = scmp.eq.s32.totalorder %s22, 0
      %s25 = sadd.s32 %s24, 1
      %s26 = scalar_select %p23, %s24, %s25
      %p29 = pneg %p23
      %p30 = scmp.eq.s32.totalorder %s14, 3
      %p31 = por %p29, %p30
      %p32 = scmp.ne.s32.totalorder %s24, %s27
      %p33 = scmp.eq.s32.totalorder %s14, 0
      %p34 = por %p32, %p33
      %p35 = scmp.ne.s32.totalorder %s24, %s27
      %p36 = scmp.eq.s32.totalorder %s19, 3
      %p37 = por %p35, %p36
      %p38 = scmp.ne.s32.totalorder %s27, %s28
      %p39 = scmp.eq.s32.totalorder %s19, 0
      %p40 = por %p38, %p39
      %p41 = scmp.ne.s32.totalorder %s27, %s28
      %p42 = scmp.eq.s32.totalorder %s20, 3
      %p43 = por %p41, %p42
      %p45 = scmp.ne.s32.totalorder %s28, %s44
      %p46 = scmp.eq.s32.totalorder %s20, 0
      %p47 = por %p45, %p46
      %s49 = sadd.s32 %s48, 1
      %p52 = scmp.eq.s32.totalorder %s14, 3
      %p53 = scmp.ne.s32.totalorder %s48, %s50
      %p54 = scmp.eq.s32.totalorder %s14, 0
      %p55 = por %p53, %p54
      %p56 = scmp.ne.s32.totalorder %s48, %s50
      %p57 = scmp.eq.s32.totalorder %s19, 3
      %p58 = por %p56, %p57
      %p59 = scmp.ne.s32.totalorder %s50, %s51
      %p60 = scmp.eq.s32.totalorder %s19, 0
      %p61 = por %p59, %p60
      %p62 = scmp.ne.s32.totalorder %s50, %s51
      %p63 = scmp.eq.s32.totalorder %s20, 3
      %p64 = por %p62, %p63
      %p66 = scmp.ne.s32.totalorder %s51, %s65
      %p67 = scmp.eq.s32.totalorder %s20, 0
      %p68 = por %p66, %p67
      %s70 = sadd.s32 %s69, 1
      %p73 = scmp.eq.s32.totalorder %s14, 3
      %p74 = scmp.ne.s32.totalorder %s69, %s71
      %p75 = scmp.eq.s32.totalorder %s14, 0
      %p76 = por %p74, %p75
      %p77 = scmp.ne.s32.totalorder %s69, %s71
      %p78 = scmp.eq.s32.totalorder %s19, 3
      %p79 = por %p77, %p78
      %p80 = scmp.ne.s32.totalorder %s71, %s72
      %p81 = scmp.eq.s32.totalorder %s19, 0
      %p82 = por %p80, %p81
      %p83 = scmp.ne.s32.totalorder %s71, %s72
      %p84 = scmp.eq.s32.totalorder %s20, 3
      %p85 = por %p83, %p84
      %p87 = scmp.ne.s32.totalorder %s72, %s86
      %p88 = scmp.eq.s32.totalorder %s20, 0
      %p89 = por %p87, %p88
      %s91 = sadd.s32 %s90, 1
      %p94 = scmp.eq.s32.totalorder %s14, 3
      %p95 = scmp.ne.s32.totalorder %s90, %s92
      %p96 = scmp.eq.s32.totalorder %s14, 0
      %p97 = por %p95, %p96
      %p98 = scmp.ne.s32.totalorder %s90, %s92
      %p99 = scmp.eq.s32.totalorder %s19, 3
      %p100 = por %p98, %p99
      %p101 = scmp.ne.s32.totalorder %s92, %s93
      %p102 = scmp.eq.s32.totalorder %s19, 0
      %p103 = por %p101, %p102
      %p104 = scmp.ne.s32.totalorder %s92, %s93
      %p105 = scmp.eq.s32.totalorder %s20, 3
      %p106 = por %p104, %p105
      %p108 = scmp.ne.s32.totalorder %s93, %s107
      %p109 = scmp.eq.s32.totalorder %s20, 0
      %p110 = por %p108, %p109
      %s112 = sadd.s32 %s111, 1
      %p115 = scmp.eq.s32.totalorder %s14, 3
      %p116 = scmp.ne.s32.totalorder %s111, %s113
      %p117 = scmp.eq.s32.totalorder %s14, 0
      %p118 = por %p116, %p117
      %p119 = scmp.ne.s32.totalorder %s111, %s113
      %p120 = scmp.eq.s32.totalorder %s19, 3
      %p121 = por %p119, %p120
      %p122 = scmp.ne.s32.totalorder %s113, %s114
      %p123 = scmp.eq.s32.totalorder %s19, 0
      %p124 = por %p122, %p123
      %p125 = scmp.ne.s32.totalorder %s113, %s114
      %p126 = scmp.eq.s32.totalorder %s20, 3
      %p127 = por %p125, %p126
      %p129 = scmp.ne.s32.totalorder %s114, %s128
      %p130 = scmp.eq.s32.totalorder %s20, 0
      %p131 = por %p129, %p130
      %s133 = sadd.s32 %s132, 1
      %p136 = scmp.eq.s32.totalorder %s14, 3
      %p137 = scmp.ne.s32.totalorder %s132, %s134
      %p138 = scmp.eq.s32.totalorder %s14, 0
      %p139 = por %p137, %p138
      %p140 = scmp.ne.s32.totalorder %s132, %s134
      %p141 = scmp.eq.s32.totalorder %s19, 3
      %p142 = por %p140, %p141
      %p143 = scmp.ne.s32.totalorder %s134, %s135
      %p144 = scmp.eq.s32.totalorder %s19, 0
      %p145 = por %p143, %p144
      %p146 = scmp.ne.s32.totalorder %s134, %s135
      %p147 = scmp.eq.s32.totalorder %s20, 3
      %p148 = por %p146, %p147
      %p150 = scmp.ne.s32.totalorder %s135, %s149
      %p151 = scmp.eq.s32.totalorder %s20, 0
      %p152 = por %p150, %p151
      %s154 = sadd.s32 %s153, 1
      %p157 = scmp.eq.s32.totalorder %s14, 3
      %p158 = scmp.ne.s32.totalorder %s153, %s155
      %p159 = scmp.eq.s32.totalorder %s14, 0
      %p160 = por %p158, %p159
      %p161 = scmp.ne.s32.totalorder %s153, %s155
      %p162 = scmp.eq.s32.totalorder %s19, 3
      %p163 = por %p161, %p162
      %p164 = scmp.ne.s32.totalorder %s155, %s156
      %p165 = scmp.eq.s32.totalorder %s19, 0
      %p166 = por %p164, %p165
      %p167 = scmp.ne.s32.totalorder %s155, %s156
      %p168 = scmp.eq.s32.totalorder %s20, 3
      %p169 = por %p167, %p168
      %p171 = scmp.ne.s32.totalorder %s156, %s170
      %p172 = scmp.eq.s32.totalorder %s20, 0
      %p173 = por %p171, %p172
      %s174 = ssub.s32 %s14, %s21
      %p175 = scmp.eq.s32.totalorder %s174, 0
      %s177 = sadd.s32 %s176, 1
      %s178 = scalar_select %p175, %s176, %s177
      %p181 = pneg %p175
      %p182 = scmp.eq.s32.totalorder %s14, 3
      %p183 = por %p181, %p182
      %p184 = scmp.ne.s32.totalorder %s176, %s179
      %p185 = scmp.eq.s32.totalorder %s14, 0
      %p186 = por %p184, %p185
      %p187 = scmp.ne.s32.totalorder %s176, %s179
      %p188 = scmp.eq.s32.totalorder %s19, 3
      %p189 = por %p187, %p188
      %p190 = scmp.ne.s32.totalorder %s179, %s180
      %p191 = scmp.eq.s32.totalorder %s19, 0
      %p192 = por %p190, %p191
      %p193 = scmp.ne.s32.totalorder %s179, %s180
      %p194 = scmp.eq.s32.totalorder %s20, 3
      %p195 = por %p193, %p194
      %p197 = scmp.ne.s32.totalorder %s180, %s196
      %p198 = scmp.eq.s32.totalorder %s20, 0
      %p199 = por %p197, %p198
      %p200 = scmp.le.s32.totalorder 1, %s14
      %p201 = scmp.lt.s32.totalorder %s14, 5
      %p202 = pnand %p200, %p201
      %p203 = pneg %p202
      // Predicated region
      $region9: #{_lambda_.1} parent=5 // pred_check
        _
      $region10: #{_lambda_.1} parent=5 // pred_check_branch
        %205 = sbr.rel (%p202) target = $region12
      $region11: #{_lambda_.1} parent=5 // pred_region
        %s206 = ssub.s32 %s14, 1
        // Predicated region
        $region13: #{_lambda_.1} parent=11 // pred_check
          %p207 = pneg %p61
        $region14: #{_lambda_.1} parent=11 // pred_check_branch
          %209 = sbr.rel (%p207) target = $region16
        $region15: #{_lambda_.1} parent=11 // pred_region
          %s211 = ssub.s32 256, 256
          %212 = vsyncadd [#allocation3], %s211
          %s213 = sshll.u32 [#allocation2], 4
          %s214 = int_to_ptr.vmem [resolvable:$true] %s213
          %219 = dma.hbm_to_vmem [thread:$0]  %s1, 256, %s214, [#allocation3], 128, 128, 8
        $region16: #{_lambda_.1} parent=11 // pred_fallthru
          _
        // Predicated region
        $region17: #{_lambda_.1} parent=11 // pred_check
          %p220 = pneg %p82
        $region18: #{_lambda_.1} parent=11 // pred_check_branch
          %222 = sbr.rel (%p220) target = $region20
        $region19: #{_lambda_.1} parent=11 // pred_region
          _
        $region20: #{_lambda_.1} parent=11 // pred_fallthru
          _
        // Predicated region
        $region21: #{_lambda_.1} parent=11 // pred_check
          %p223 = pneg %p103
        $region22: #{_lambda_.1} parent=11 // pred_check_branch
          %225 = sbr.rel (%p223) target = $region24
        $region23: #{_lambda_.1} parent=11 // pred_region
          _
        $region24: #{_lambda_.1} parent=11 // pred_fallthru
          _
        // Predicated region
        $region25: #{_lambda_.1} parent=11 // pred_check
          %p226 = pneg %p124
        $region26: #{_lambda_.1} parent=11 // pred_check_branch
          %228 = sbr.rel (%p226) target = $region28
        $region27: #{_lambda_.1} parent=11 // pred_region
          _
        $region28: #{_lambda_.1} parent=11 // pred_fallthru
          _
        // Predicated region
        $region29: #{_lambda_.1} parent=11 // pred_check
          %p229 = pneg %p145
        $region30: #{_lambda_.1} parent=11 // pred_check_branch
          %231 = sbr.rel (%p229) target = $region32
        $region31: #{_lambda_.1} parent=11 // pred_region
          _
        $region32: #{_lambda_.1} parent=11 // pred_fallthru
          _
        // Predicated region
        $region33: #{_lambda_.1} parent=11 // pred_check
          %p232 = pneg %p166
        $region34: #{_lambda_.1} parent=11 // pred_check_branch
          %234 = sbr.rel (%p232) target = $region36
        $region35: #{_lambda_.1} parent=11 // pred_region
          _
        $region36: #{_lambda_.1} parent=11 // pred_fallthru
          _
      $region12: #{_lambda_.1} parent=5 // pred_fallthru
        _
      %p235 = scmp.lt.s32.totalorder %s14, 4
      // Predicated region
      $region37: #{_lambda_.1} parent=5 // pred_check
        %p236 = pneg %p235
      $region38: #{_lambda_.1} parent=5 // pred_check_branch
        %238 = sbr.rel (%p236) target = $region40
      $region39: #{_lambda_.1} parent=5 // pred_region
        // Predicated region
        $region41: #{_lambda_.1} parent=39 // pred_check
          %p239 = pneg %p34
        $region42: #{_lambda_.1} parent=39 // pred_check_branch
          %241 = sbr.rel (%p239) target = $region44
        $region43: #{_lambda_.1} parent=39 // pred_region
          %s242 = smul.u32 2, %s14
          %p243 = scmp.lt.s32.totalorder %s242, 7
          %s244 = scalar_select %p243, %s242, 7
          %s245 = smul.addr %s244, 4
          %s246 = scalar_lea.vmem %s0, %s245
          %s247 = smul.u32 2, %s14
        $region44: #{_lambda_.1} parent=39 // pred_fallthru
          _
      $region40: #{_lambda_.1} parent=5 // pred_fallthru
        _
      %p248 = scmp.le.s32.totalorder 1, %s14
      %p249 = scmp.lt.s32.totalorder %s14, 5
      %p250 = pnand %p248, %p249
      %p251 = pneg %p250
      // Predicated region
      $region45: #{_lambda_.1} parent=5 // pred_check
        _
      $region46: #{_lambda_.1} parent=5 // pred_check_branch
        %253 = sbr.rel (%p250) target = $region48
      $region47: #{_lambda_.1} parent=5 // pred_region
        %s254 = ssub.s32 %s14, 1
        // Predicated region
        $region49: #{_lambda_.1} parent=47 // pred_check
          %p255 = pneg %p61
        $region50: #{_lambda_.1} parent=47 // pred_check_branch
          %257 = sbr.rel (%p255) target = $region52
        $region51: #{_lambda_.1} parent=47 // pred_region
          %258 = dma.done [#allocation3], 256
        $region52: #{_lambda_.1} parent=47 // pred_fallthru
          _
        %s259 = smul.u32 2, %s19
        %p260 = scmp.lt.s32.totalorder %s259, 7
        %s261 = scalar_select %p260, %s259, 7
        %s262 = smul.addr %s261, 4
        %s263 = scalar_lea.vmem %s0, %s262
        %p264 = pneg %p40
        %p265 = pneg %p37
        %p266 = pneg %p61
        %p267 = pneg %p58
        %p268 = pneg %p82
        %p269 = pneg %p79
        %p270 = pneg %p103
        %p271 = pneg %p100
        %p272 = pneg %p124
        %p273 = pneg %p121
        %p274 = pneg %p145
        %p275 = pneg %p142
        %p276 = pneg %p166
        %p277 = pneg %p163
        %p278 = pneg %p192
        %p279 = pneg %p189
        %s280 = smul.u32 2, %s19
        %p281 = scmp.lt.s32.totalorder %s280, 7
        %s282 = scalar_select %p281, %s280, 7
        %s283 = smul.addr %s282, 8
        %s284 = scalar_lea.vmem %s7, %s283
        %s285 = smul.u32 2, %s19
        %p286 = scmp.lt.s32.totalorder %s285, 7
        %s287 = scalar_select %p286, %s285, 7
        %s288 = smul.addr %s287, 4
        %s289 = scalar_lea.vmem %s0, %s288
        %s290 = smul.u32 2, %s19
        %s291 = smul.u32 2, %s19
        %p292 = scmp.lt.s32.totalorder %s291, 7
        %s293 = scalar_select %p292, %s291, 7
        %s294 = smul.addr %s293, 8
        %s295 = scalar_lea.vmem %s7, %s294
        %s296 = smul.u32 2, %s19
        %v297 = vld [vmem:[%s289] sm:$0xf]
        %v298 = vld [vmem:[%s289 + $0x4] sm:$0xf]
        %v299 = vunpack.c.l.bf16 %v297
        %v300 = vunpack.c.l.bf16 %v298
        %v301 = vld [vmem:[#allocation2] sm:$0xff]
        %v302 = vld [vmem:[#allocation2 + $0x8] sm:$0xff]
        %v303 = vld [vmem:[%s2] sm:$0x1]
        %v305 = vlaneseq
        %v306 = vshrl.u32 %v305, 7
        %v307 = vsub.s32 0, %v306
        %v308 = vrot.slane %v303, %v307
        %vm310 = vcmask 130048
        %v312 = vsel %vm310, %v299, 0
        %v315 = vsel %vm310, %v300, 0
        %317 = vmatprep.subr.mxu0 0.0
        %318 = vmatpush1.msra.mxu0 %v301
        %319 = vmatprep.subr.mxu0 0.0
        %320 = vmatpush1.msra.mxu0 %v302
        %321 = vmatprep.subr.mxu0 0.0
        %322 = vmatpush1.msra.mxu0 0.0
        %323 = vmatprep.subr.mxu0 0.0
        %324 = vmatpush1.msra.mxu0 0.0
        %325 = vmatprep.subr.mxu0 0.0
        %326 = vmatpush1.msra.mxu0 0.0
        %327 = vmatprep.subr.mxu0 0.0
        %328 = vmatpush1.msra.mxu0 0.0
        %329 = vmatprep.subr.mxu0 0.0
        %330 = vmatpush1.msra.mxu0 0.0
        %331 = vmatprep.subr.mxu0 0.0
        %332 = vmatpush1.msra.mxu0 0.0
        %333 = vmatprep.subr.mxu0 0.0
        %334 = vmatpush1.msra.mxu0 0.0
        %335 = vmatprep.subr.mxu0 0.0
        %336 = vmatpush1.msra.mxu0 0.0
        %337 = vmatprep.subr.mxu0 0.0
        %338 = vmatpush1.msra.mxu0 0.0
        %339 = vmatprep.subr.mxu0 0.0
        %340 = vmatpush1.msra.mxu0 0.0
        %341 = vmatprep.subr.mxu0 0.0
        %342 = vmatpush1.msra.mxu0 0.0
        %343 = vmatprep.subr.mxu0 0.0
        %344 = vmatpush1.msra.mxu0 0.0
        %345 = vmatprep.subr.mxu0 0.0
        %346 = vmatpush1.msra.mxu0 0.0
        %347 = vmatprep.subr.mxu0 0.0
        %348 = vmatpush1.msra.mxu0 0.0
        %349 = vmatprep.subr.mxu0 0.0
        %350 = vmatpush1.msra.mxu0 0.0
        %351 = vmatprep.subr.mxu0 0.0
        %352 = vmatpush1.msra.mxu0 0.0
        %353 = vmatprep.subr.mxu0 0.0
        %354 = vmatpush1.msra.mxu0 0.0
        %355 = vmatprep.subr.mxu0 0.0
        %356 = vmatpush1.msra.mxu0 0.0
        %357 = vmatprep.subr.mxu0 0.0
        %358 = vmatpush1.msra.mxu0 0.0
        %359 = vmatprep.subr.mxu0 0.0
        %360 = vmatpush1.msra.mxu0 0.0
        %361 = vmatprep.subr.mxu0 0.0
        %362 = vmatpush1.msra.mxu0 0.0
        %363 = vmatprep.subr.mxu0 0.0
        %364 = vmatpush1.msra.mxu0 0.0
        %365 = vmatprep.subr.mxu0 0.0
        %366 = vmatpush1.msra.mxu0 0.0
        %367 = vmatprep.subr.mxu0 0.0
        %368 = vmatpush1.msra.mxu0 0.0
        %369 = vmatprep.subr.mxu0 0.0
        %370 = vmatpush1.msra.mxu0 0.0
        %371 = vmatprep.subr.mxu0 0.0
        %372 = vmatpush1.msra.mxu0 0.0
        %373 = vmatprep.subr.mxu0 0.0
        %374 = vmatpush1.msra.mxu0 0.0
        %375 = vmatprep.subr.mxu0 0.0
        %376 = vmatpush1.msra.mxu0 0.0
        %377 = vmatprep.subr.mxu0 0.0
        %378 = vmatpush1.msra.mxu0 0.0
        %379 = vmatprep.subr.mxu0 0.0
        %380 = vmatpush1.msra.mxu0 0.0
        %381 = vmatprep.mubr.f32.mxu0 0.0
        %382 = vmatmul.mubr.f32.gmra.mrb[0].mxu0 %v312
        %v383 = vpop.f32.mrb[0].mxu0
        %v384 = vadd.f32 %v308, %v383
        %v385 = vpop.f32.mrb[0].mxu0
        %386 = vmatprep.mubr.f32.mxu0 0.0
        %387 = vmatmul.mubr.f32.gmra.mrb[0].mxu0 %v315
        %v388 = vpop.f32.mrb[0].mxu0
        %v389 = vadd.f32 %v308, %v388
        %v390 = vpop.f32.mrb[0].mxu0
        %391 = vdwg.mxu0
        %v392 = vmax.f32 %v384, 0.0
        %v393 = vmax.f32 %v389, 0.0
        %v394 = vld [vmem:[%s3] sm:$0xff]
        %v395 = vld [vmem:[%s3 + $0x8] sm:$0xff]
        %v396 = vld [vmem:[%s3 + $0x10] sm:$0xff]
        %v397 = vld [vmem:[%s3 + $0x18] sm:$0xff]
        %v398 = vld [vmem:[%s4] sm:$0x1]
        %v400 = vlaneseq
        %v401 = vshrl.u32 %v400, 7
        %v402 = vsub.s32 0, %v401
        %v403 = vrot.slane %v398, %v402
        %vm405 = vcmask 261120
        %v407 = vsel %vm405, %v392, 0
        %v410 = vsel %vm405, %v393, 0
        %412 = vmatprep.subr.mxu0 0.0
        %413 = vmatpush1.msra.mxu0 %v394
        %414 = vmatprep.subr.mxu0 0.0
        %415 = vmatpush1.msra.mxu0 %v395
        %416 = vmatprep.subr.mxu0 0.0
        %417 = vmatpush1.msra.mxu0 %v396
        %418 = vmatprep.subr.mxu0 0.0
        %419 = vmatpush1.msra.mxu0 %v397
        %420 = vmatprep.subr.mxu0 0.0
        %421 = vmatpush1.msra.mxu0 0.0
        %422 = vmatprep.subr.mxu0 0.0
        %423 = vmatpush1.msra.mxu0 0.0
        %424 = vmatprep.subr.mxu0 0.0
        %425 = vmatpush1.msra.mxu0 0.0
        %426 = vmatprep.subr.mxu0 0.0
        %427 = vmatpush1.msra.mxu0 0.0
        %428 = vmatprep.subr.mxu0 0.0
        %429 = vmatpush1.msra.mxu0 0.0
        %430 = vmatprep.subr.mxu0 0.0
        %431 = vmatpush1.msra.mxu0 0.0
        %432 = vmatprep.subr.mxu0 0.0
        %433 = vmatpush1.msra.mxu0 0.0
        %434 = vmatprep.subr.mxu0 0.0
        %435 = vmatpush1.msra.mxu0 0.0
        %436 = vmatprep.subr.mxu0 0.0
        %437 = vmatpush1.msra.mxu0 0.0
        %438 = vmatprep.subr.mxu0 0.0
        %439 = vmatpush1.msra.mxu0 0.0
        %440 = vmatprep.subr.mxu0 0.0
        %441 = vmatpush1.msra.mxu0 0.0
        %442 = vmatprep.subr.mxu0 0.0
        %443 = vmatpush1.msra.mxu0 0.0
        %444 = vmatprep.subr.mxu0 0.0
        %445 = vmatpush1.msra.mxu0 0.0
        %446 = vmatprep.subr.mxu0 0.0
        %447 = vmatpush1.msra.mxu0 0.0
        %448 = vmatprep.subr.mxu0 0.0
        %449 = vmatpush1.msra.mxu0 0.0
        %450 = vmatprep.subr.mxu0 0.0
        %451 = vmatpush1.msra.mxu0 0.0
        %452 = vmatprep.subr.mxu0 0.0
        %453 = vmatpush1.msra.mxu0 0.0
        %454 = vmatprep.subr.mxu0 0.0
        %455 = vmatpush1.msra.mxu0 0.0
        %456 = vmatprep.subr.mxu0 0.0
        %457 = vmatpush1.msra.mxu0 0.0
        %458 = vmatprep.subr.mxu0 0.0
        %459 = vmatpush1.msra.mxu0 0.0
        %460 = vmatprep.subr.mxu0 0.0
        %461 = vmatpush1.msra.mxu0 0.0
        %462 = vmatprep.subr.mxu0 0.0
        %463 = vmatpush1.msra.mxu0 0.0
        %464 = vmatprep.subr.mxu0 0.0
        %465 = vmatpush1.msra.mxu0 0.0
        %466 = vmatprep.subr.mxu0 0.0
        %467 = vmatpush1.msra.mxu0 0.0
        %468 = vmatprep.subr.mxu0 0.0
        %469 = vmatpush1.msra.mxu0 0.0
        %470 = vmatprep.subr.mxu0 0.0
        %471 = vmatpush1.msra.mxu0 0.0
        %472 = vmatprep.subr.mxu0 0.0
        %473 = vmatpush1.msra.mxu0 0.0
        %474 = vmatprep.subr.mxu0 0.0
        %475 = vmatpush1.msra.mxu0 0.0
        %476 = vmatprep.mubr.f32.mxu0 0.0
        %477 = vmatmul.mubr.f32.gmra.mrb[0].mxu0 %v407
        %v478 = vpop.f32.mrb[0].mxu0
        %v479 = vadd.f32 %v403, %v478
        %v480 = vpop.f32.mrb[0].mxu0
        %481 = vmatprep.mubr.f32.mxu0 0.0
        %482 = vmatmul.mubr.f32.gmra.mrb[0].mxu0 %v410
        %v483 = vpop.f32.mrb[0].mxu0
        %v484 = vadd.f32 %v403, %v483
        %v485 = vpop.f32.mrb[0].mxu0
        %486 = vdwg.mxu0
        %v487 = vmax.f32 %v479, 0.0
        %v488 = vmax.f32 %v484, 0.0
        %v489 = vld [vmem:[%s5] sm:$0xff]
        %v490 = vld [vmem:[%s5 + $0x8] sm:$0xff]
        %v491 = vld [vmem:[%s5 + $0x10] sm:$0xff]
        %v492 = vld [vmem:[%s5 + $0x18] sm:$0xff]
        %v493 = vld [vmem:[%s6] sm:$0x1]
        %v495 = vlaneseq
        %v496 = vshrl.u32 %v495, 7
        %v497 = vsub.s32 0, %v496
        %v498 = vrot.slane %v493, %v497
        %v501 = vsel %vm405, %v487, 0
        %v504 = vsel %vm405, %v488, 0
        %506 = vmatprep.subr.mxu0 0.0
        %507 = vmatpush1.msra.mxu0 %v489
        %508 = vmatprep.subr.mxu0 0.0
        %509 = vmatpush1.msra.mxu0 %v490
        %510 = vmatprep.subr.mxu0 0.0
        %511 = vmatpush1.msra.mxu0 %v491
        %512 = vmatprep.subr.mxu0 0.0
        %513 = vmatpush1.msra.mxu0 %v492
        %514 = vmatprep.subr.mxu0 0.0
        %515 = vmatpush1.msra.mxu0 0.0
        %516 = vmatprep.subr.mxu0 0.0
        %517 = vmatpush1.msra.mxu0 0.0
        %518 = vmatprep.subr.mxu0 0.0
        %519 = vmatpush1.msra.mxu0 0.0
        %520 = vmatprep.subr.mxu0 0.0
        %521 = vmatpush1.msra.mxu0 0.0
        %522 = vmatprep.subr.mxu0 0.0
        %523 = vmatpush1.msra.mxu0 0.0
        %524 = vmatprep.subr.mxu0 0.0
        %525 = vmatpush1.msra.mxu0 0.0
        %526 = vmatprep.subr.mxu0 0.0
        %527 = vmatpush1.msra.mxu0 0.0
        %528 = vmatprep.subr.mxu0 0.0
        %529 = vmatpush1.msra.mxu0 0.0
        %530 = vmatprep.subr.mxu0 0.0
        %531 = vmatpush1.msra.mxu0 0.0
        %532 = vmatprep.subr.mxu0 0.0
        %533 = vmatpush1.msra.mxu0 0.0
        %534 = vmatprep.subr.mxu0 0.0
        %535 = vmatpush1.msra.mxu0 0.0
        %536 = vmatprep.subr.mxu0 0.0
        %537 = vmatpush1.msra.mxu0 0.0
        %538 = vmatprep.subr.mxu0 0.0
        %539 = vmatpush1.msra.mxu0 0.0
        %540 = vmatprep.subr.mxu0 0.0
        %541 = vmatpush1.msra.mxu0 0.0
        %542 = vmatprep.subr.mxu0 0.0
        %543 = vmatpush1.msra.mxu0 0.0
        %544 = vmatprep.subr.mxu0 0.0
        %545 = vmatpush1.msra.mxu0 0.0
        %546 = vmatprep.subr.mxu0 0.0
        %547 = vmatpush1.msra.mxu0 0.0
        %548 = vmatprep.subr.mxu0 0.0
        %549 = vmatpush1.msra.mxu0 0.0
        %550 = vmatprep.subr.mxu0 0.0
        %551 = vmatpush1.msra.mxu0 0.0
        %552 = vmatprep.subr.mxu0 0.0
        %553 = vmatpush1.msra.mxu0 0.0
        %554 = vmatprep.subr.mxu0 0.0
        %555 = vmatpush1.msra.mxu0 0.0
        %556 = vmatprep.subr.mxu0 0.0
        %557 = vmatpush1.msra.mxu0 0.0
        %558 = vmatprep.subr.mxu0 0.0
        %559 = vmatpush1.msra.mxu0 0.0
        %560 = vmatprep.subr.mxu0 0.0
        %561 = vmatpush1.msra.mxu0 0.0
        %562 = vmatprep.subr.mxu0 0.0
        %563 = vmatpush1.msra.mxu0 0.0
        %564 = vmatprep.subr.mxu0 0.0
        %565 = vmatpush1.msra.mxu0 0.0
        %566 = vmatprep.subr.mxu0 0.0
        %567 = vmatpush1.msra.mxu0 0.0
        %568 = vmatprep.subr.mxu0 0.0
        %569 = vmatpush1.msra.mxu0 0.0
        %570 = vmatprep.mubr.f32.mxu0 0.0
        %571 = vmatmul.mubr.f32.gmra.mrb[0].mxu0 %v501
        %v572 = vpop.f32.mrb[0].mxu0
        %v573 = vadd.f32 %v498, %v572
        %v574 = vpop.f32.mrb[0].mxu0
        %575 = vmatprep.mubr.f32.mxu0 0.0
        %576 = vmatmul.mubr.f32.gmra.mrb[0].mxu0 %v504
        %v577 = vpop.f32.mrb[0].mxu0
        %v578 = vadd.f32 %v498, %v577
        %v579 = vpop.f32.mrb[0].mxu0
        %580 = vdwg.mxu0
        %v581 = vlaneseq
        %v582 = vand.u32 %v581, 127
        %v583 = vmax.f32 %v573, 0.0
        %v584 = vmax.f32 %v578, 0.0
        %v585 = vand.u32 2147483647, %v573
        %v586 = vand.u32 2147483647, %v578
        %v587 = vsub.f32 0.0, %v585
        %v588 = vsub.f32 0.0, %v586
        %v589 = vmul.f32 %v587, 1.442695
        %v590 = vpow.pop %v589
        %v591 = vmul.f32 %v588, 1.442695
        %v592 = vpow.pop %v591
        %v593 = vadd.f32 %v590, 1.0
        %v594 = vlog2.pop %v593
        %v595 = vmul.f32 %v594, 0.6931472
        %v596 = vmul.f32 -0.5, %v590
        %v597 = vadd.f32 %v596, 1.0
        %v598 = vmul.f32 %v597, %v590
        %v599 = vand.u32 2147483647, %v590
        %vm600 = vcmp.lt.f32.partialorder %v599, 0.0004427343
        %v601 = vsel %vm600, %v598, %v595
        %v602 = vadd.f32 %v592, 1.0
        %v603 = vlog2.pop %v602
        %v604 = vmul.f32 %v603, 0.6931472
        %v605 = vmul.f32 -0.5, %v592
        %v606 = vadd.f32 %v605, 1.0
        %v607 = vmul.f32 %v606, %v592
        %v608 = vand.u32 2147483647, %v592
        %vm609 = vcmp.lt.f32.partialorder %v608, 0.0004427343
        %v610 = vsel %vm609, %v607, %v604
        %v611 = vadd.f32 %v583, %v601
        %v612 = vadd.f32 %v584, %v610
        %vm613 = vcmp.lt.s32.totalorder %v582, 4
        %vm614 = vcmp.ge.s32.totalorder %v582, 8
        %vm615 = vcmp.lt.s32.totalorder %v582, 12
        %vm616 = vmand %vm614, %vm615
        %v617 = vadd.f32 %v611, 1.0
        %v618 = vadd.f32 %v612, 1.0
        %v619 = vsel %vm616, %v617, %v611
        %v620 = vsel %vm616, %v618, %v612
        %v621 = vsel %vm613, %v573, %v619
        %v622 = vsel %vm613, %v578, %v620
        %623 = vst.msk [vmem:[%s295] sm:$0xff] %vm310, %v621
        %624 = vst.msk [vmem:[%s295 + $0x8] sm:$0xff] %vm310, %v622
        %s625 = smul.u32 2, %s19
        %p626 = scmp.lt.s32.totalorder %s625, 7
        %s627 = scalar_select %p626, %s625, 7
        %s628 = smul.addr %s627, 8
        %s629 = scalar_lea.vmem %s7, %s628
        // Predicated region
        $region53: #{_lambda_.1} parent=47 // pred_check
          %p630 = pneg %p189
        $region54: #{_lambda_.1} parent=47 // pred_check_branch
          %632 = sbr.rel (%p630) target = $region56
        $region55: #{_lambda_.1} parent=47 // pred_region
          %s633 = smul.u32 2, %s19
        $region56: #{_lambda_.1} parent=47 // pred_fallthru
          _
      $region48: #{_lambda_.1} parent=5 // pred_fallthru
        _
      %p634 = scmp.le.s32.totalorder 2, %s14
      // Predicated region
      $region57: #{_lambda_.1} parent=5 // pred_check
        %p635 = pneg %p634
      $region58: #{_lambda_.1} parent=5 // pred_check_branch
        %637 = sbr.rel (%p635) target = $region60
      $region59: #{_lambda_.1} parent=5 // pred_region
        %s638 = ssub.s32 %s14, 2
        // Predicated region
        $region61: #{_lambda_.1} parent=59 // pred_check
          %p639 = pneg %p195
        $region62: #{_lambda_.1} parent=59 // pred_check_branch
          %641 = sbr.rel (%p639) target = $region64
        $region63: #{_lambda_.1} parent=59 // pred_region
          %s642 = smul.u32 2, %s20
          %p643 = scmp.lt.s32.totalorder %s642, 7
          %s644 = scalar_select %p643, %s642, 7
          %s645 = smul.addr %s644, 8
          %s646 = scalar_lea.vmem %s7, %s645
        $region64: #{_lambda_.1} parent=59 // pred_fallthru
          _
      $region60: #{_lambda_.1} parent=5 // pred_fallthru
        _
    $region6: #{_lambda_.1} parent=1 // loop_footer
      %s18 = sadd.s32 1, %s14
    $region7: #{_lambda_.1} parent=1 // loop_footer_branch
      %13 = sbr.rel target = $region3
    $region8: #{_lambda_.1} parent=1 // loop_exit
      _
    %647 = vsyncpa [#allocation3], 1
    %s648 = scalar_lea.sflag [#allocation3], 1
    %649 = vsyncpa %s648, 1

</llo_original>
